<compile_context>
chip_gen: v7x
topology: tpu7x:2x2x1
jax: 0.10.0
libtpu: 0.0.40
codegen_flags: <defaults>
</compile_context>

<pallas_src>
import functools

import numpy as np

import jax
import jax.numpy as jnp
from jax.experimental import pallas as pl
from jax.experimental.pallas import tpu as pltpu

LANE = 128
# bf16 MXU operands (activations + conv taps); accumulation stays f32 via
# preferred_element_type.  Supported on v5e/v6e/v7x MXUs.
MXU_INPUT_DTYPE = jnp.bfloat16


def _round_up(x, m):
    return ((x + m - 1) // m) * m


@functools.lru_cache(maxsize=None)
def _roll_moves_forward():
    """Probe pltpu.roll's lane-shift direction once (jnp.roll convention or not)."""
    def k(x_ref, o_ref):
        o_ref[...] = pltpu.roll(x_ref[...], 1, axis=1)
    x = jnp.zeros((8, LANE), jnp.float32).at[0, 0].set(1.0)
    r = pl.pallas_call(k, out_shape=jax.ShapeDtypeStruct((8, LANE), jnp.float32))(x)
    fwd = bool(r[0, 1] == 1.0)
    bwd = bool(r[0, LANE - 1] == 1.0)
    assert fwd != bwd, "unexpected pltpu.roll semantics"
    return fwd


# ------------------------------ fused kernel ---------------------------------

def _fused_igdn_conv_kernel(*refs, phase_offsets, ho, wof, shifts, has_addend):
    """IGDN + convolution (+ optional fused cross-branch add), one image/step.

    refs (inputs then outputs):
      x_ref   : (1, Hp, Wf)     padded input rows, (w, c)-flattened, lane-padded
      ag_ref  : (2C-1, Wf)      per-lane gamma tables, one row per channel offset
      b_ref   : (1, Wf)         IGDN beta tiled across pixels
      w_ref   : (T, Wf, wof)    per-row-tap banded conv weight matrices (bf16)
      bias_ref: (1, wof)        conv bias tiled across output pixels (lane-padded)
      add_ref : (1, ho, P*wof)  [optional] residual branch to add before store
      o_ref   : (1, ho, P*wof)  P row-phases packed along lanes (free interleave)
    """
    if has_addend:
        x_ref, ag_ref, b_ref, w_ref, bias_ref, add_ref, o_ref = refs
    else:
        x_ref, ag_ref, b_ref, w_ref, bias_ref, o_ref = refs
        add_ref = None

    x = x_ref[0]                                          # (Hp, Wf) f32
    xsq = x * x
    # IGDN norm: the per-pixel (C,C) gamma is realized as 2C-1 VPU multiplies +
    # XLU lane-rolls on the flattened row -- no (Wp*C)^2 block-diagonal matmul,
    # no (Wp*C)^2 gamma in VMEM.
    # TODO(synk): for production C >= 128 switch to one dense (C,C) MXU
    #   contraction on an (Hp*Wp, C) activation view instead of 2C-1 rolls.
    norm = b_ref[...] + ag_ref[0:1, :] * xsq              # channel offset 0
    for j in range(1, len(shifts)):
        norm = norm + pltpu.roll(ag_ref[j:j + 1, :] * xsq, shifts[j], axis=1)
    # clamp only guards fp noise: reparameterized GDN params keep norm >= 0,
    # so this matches the reference; zero-padded pixels stay exactly zero.
    y = x * jnp.sqrt(jnp.maximum(norm, 0.0))              # IGDN; IGDN(0) == 0

    bias = bias_ref[...]                                  # hoisted out of the loop
    # TODO(synk): MXU M is only ho (8-16) rows per dot here; at production
    #   sizes stack a batch block / several row tiles to reach M >= 128/256.
    t = 0
    for p, offs in enumerate(phase_offsets):
        acc = jnp.dot(y[offs[0]:offs[0] + ho, :].astype(MXU_INPUT_DTYPE),
                      w_ref[t], preferred_element_type=jnp.float32)
        t += 1
        for off in offs[1:]:
            acc = acc + jnp.dot(y[off:off + ho, :].astype(MXU_INPUT_DTYPE),
                                w_ref[t], preferred_element_type=jnp.float32)
            t += 1
        res = acc + bias
        if has_addend:                                    # fused cross-branch add
            res = res + add_ref[0, :, p * wof:(p + 1) * wof]
        o_ref[0, :, p * wof:(p + 1) * wof] = res.astype(o_ref.dtype)


# ------------------------------ branch driver ---------------------------------

def _prep_input(x_nhwc, plan):
    """Zero-pad (conv pad + lane pad) and flatten rows to (N, Hp, W_pad*C)."""
    (pt, pb), (pleft, pright) = plan["pads"]
    xp = jnp.pad(x_nhwc, ((0, 0), (pt, pb), (pleft, pright), (0, 0)))
    n, hp, wp, c = xp.shape
    x2 = xp.reshape(n, hp, wp * c)
    if plan["s2d"]:                        # row space-to-depth for stride-2 conv
        x2 = x2.reshape(n, hp // 2, 2 * wp * c)
    return x2


def _vmem_limit_bytes(hp, wf, plan, arrs, has_addend):
    """Generous per-branch scoped-VMEM budget (block bytes, 2-deep buffering)."""
    ho, P, wof = plan["ho"], plan["n_phase"], plan["wof_pad"]
    x_b = hp * wf * 4
    out_b = ho * P * wof * 4
    add_b = out_b if has_addend else 0
    w_b = sum(int(a.size) * a.dtype.itemsize
              for a in (arrs["taps"], arrs["gdn_a"], arrs["beta_t"], arrs["bias_f"]))
    # TODO(synk): grid-invariant weights still get 2 buffers; single-buffer them
    #   and add a row-tiled (haloed) grid axis before the double-buffered total
    #   approaches v7x's 64 MiB VMEM at production Cin/Cout/W.
    est = 2 * (x_b + out_b + add_b + w_b)
    return int(min(64 * 2 ** 20, max(8 * 2 ** 20, 4 * est)))


def _run_branch(x_nhwc, arrs, plan, addend=None):
    """One fused IGDN+conv branch.  Returns (N, ho, P*wof_pad) lane-dense rows."""
    n = x_nhwc.shape[0]
    x2 = _prep_input(x_nhwc, plan)
    hp, wf = x2.shape[1], x2.shape[2]
    ho, P, wof = plan["ho"], plan["n_phase"], plan["wof_pad"]
    taps = arrs["taps"]
    has_addend = addend is not None

    kernel = functools.partial(
        _fused_igdn_conv_kernel, phase_offsets=plan["phase_offsets"], ho=ho,
        wof=wof, shifts=plan["gdn_shifts"], has_addend=has_addend)

    in_specs = [
        pl.BlockSpec((1, hp, wf), lambda i: (i, 0, 0)),
        pl.BlockSpec(arrs["gdn_a"].shape, lambda i: (0, 0)),
        pl.BlockSpec((1, wf), lambda i: (0, 0)),
        pl.BlockSpec(taps.shape, lambda i: (0, 0, 0)),
        pl.BlockSpec((1, wof), lambda i: (0, 0)),
    ]
    args = [x2, arrs["gdn_a"], arrs["beta_t"], taps, arrs["bias_f"]]
    if has_addend:
        in_specs.append(pl.BlockSpec((1, ho, P * wof), lambda i: (i, 0, 0)))
        args.append(addend)

    return pl.pallas_call(
        kernel,
        out_shape=jax.ShapeDtypeStruct((n, ho, P * wof), jnp.float32),
        grid=(n,),        # N=2 -> one image per v7x TensorCore ("parallel")
        in_specs=in_specs,
        out_specs=pl.BlockSpec((1, ho, P * wof), lambda i: (i, 0, 0)),
        compiler_params=pltpu.CompilerParams(
            dimension_semantics=("parallel",),
            vmem_limit_bytes=_vmem_limit_bytes(hp, wf, plan, arrs, has_addend)),
    )(*args)


def _to_nhwc(flat, plan):
    """(N, ho, P*wof_pad) kernel rows -> NHWC (drops lane padding; free reshape)."""
    n, ho, _ = flat.shape
    P, wout, cout = plan["n_phase"], plan["W_out"], plan["cout"]
    x = flat.reshape(n, ho * P, plan["wof_pad"])[:, :, :wout * cout]
    return x.reshape(n, ho * P, wout, cout)


def got_conv_forward(inputs_h, inputs_l, params, *, plans, is_endpoint=False):
    # TODO(synk): hh and ll are independent; at tiny N merge them into one
    #   pallas_call (extra grid axis) to amortize per-call overhead.
    hh_flat = _run_branch(inputs_h, params["hh"], plans["hh"])
    ll_flat = _run_branch(inputs_l, params["ll"], plans["ll"])

    # convLH(conv_ll) with conv_hh fused in as the addend; its 2 row phases are
    # packed along lanes, so the row interleave is a free contiguous reshape
    # and outputs_h = conv_hh + conv_lh comes straight out of the kernel.
    lh_plan = plans["lh"]
    assert hh_flat.shape[1:] == (lh_plan["n_phase"] * lh_plan["ho"],
                                 lh_plan["wof_pad"])
    assert plans["hh"]["wof_pad"] == plans["hh"]["W_out"] * plans["hh"]["cout"]
    hh_pairs = hh_flat.reshape(hh_flat.shape[0], lh_plan["ho"],
                               lh_plan["n_phase"] * lh_plan["wof_pad"])
    conv_ll = _to_nhwc(ll_flat, plans["ll"])
    out_h_flat = _run_branch(conv_ll, params["lh"], lh_plan, addend=hh_pairs)
    outputs_h = _to_nhwc(out_h_flat, lh_plan)
    if is_endpoint:
        return outputs_h, None

    # convHL(conv_hh) with conv_ll fused in as the addend (its lane padding is
    # zero-filled, so padded columns stay zero and are sliced off below).
    hl_plan = plans["hl"]
    assert ll_flat.shape[1:] == (hl_plan["ho"], hl_plan["wof_pad"])
    assert (plans["ll"]["W_out"], plans["ll"]["cout"]) == (hl_plan["W_out"],
                                                           hl_plan["cout"])
    conv_hh = _to_nhwc(hh_flat, plans["hh"])
    out_l_flat = _run_branch(conv_hh, params["hl"], hl_plan, addend=ll_flat)
    outputs_l = _to_nhwc(out_l_flat, hl_plan)
    return outputs_h, outputs_l


# -------------------- weight preprocessing (init-time, numpy) ----------------

def _igdn_roll_tables(gamma_oi, beta, wf, c):
    """Per-channel-offset gamma tables + lane shifts for the roll-based IGDN.

    norm = beta_tiled + sum_delta roll(tables[delta] * xsq, shift_delta), where
    tables[delta][s] = gamma[s%C + delta, s%C] (0 outside [0,C)), i.e. each term
    routes source channel c -> destination channel c+delta within a pixel block.
    """
    g = np.asarray(gamma_oi, np.float32)       # g[d, c]: weight of xsq_c in norm_d
    assert wf % c == 0
    lane_ch = np.arange(wf) % c
    deltas = [0] + [d for d in range(-(c - 1), c) if d != 0]
    fwd = _roll_moves_forward()
    tables = np.zeros((len(deltas), wf), np.float32)
    shifts = []
    for j, d in enumerate(deltas):
        dest = lane_ch + d
        ok = (dest >= 0) & (dest < c)
        tables[j, ok] = g[dest[ok], lane_ch[ok]]
        shifts.append(int((d if fwd else -d) % wf))
    beta_t = np.tile(np.asarray(beta, np.float32), wf // c)[None, :]
    return tables, tuple(shifts), beta_t


def _prep_deconv_s1(wt, b, H, W, cin, cout, K=5):
    """ConvTranspose2d(cin, cout, K, stride=1, padding=(K-1)//2) -> taps/plan."""
    assert LANE % cin == 0
    pad = (K - 1) // 2
    Wp = _round_up((W + 2 * pad) * cin, LANE) // cin
    w = np.asarray(wt, np.float32)                           # (cin, cout, K, K)
    wof = W * cout
    wof_pad = _round_up(wof, LANE)
    taps = np.zeros((K, Wp * cin, wof_pad), np.float32)
    for dh in range(K):
        for j in range(W):
            for dw in range(K):
                pw = j + dw                                  # padded column
                taps[dh, pw * cin:(pw + 1) * cin, j * cout:(j + 1) * cout] = \
                    w[:, :, K - 1 - dh, K - 1 - dw]          # flipped kernel
    bias = np.zeros((1, wof_pad), np.float32)
    bias[0, :wof] = np.tile(np.asarray(b, np.float32), W)
    plan = dict(pads=((pad, pad), (pad, Wp - W - pad)),
                phase_offsets=(tuple(range(K)),),
                ho=H, W_out=W, cout=cout, n_phase=1, s2d=False, wof_pad=wof_pad)
    return taps, bias, plan


def _prep_deconv_s2(wt, b, H, W, cin, cout, K=4):
    """ConvTranspose2d(k=4, s=2, p=1): sub-pixel (2 row phases) decomposition."""
    assert LANE % cin == 0
    Wp = _round_up((W + 2) * cin, LANE) // cin
    w = np.asarray(wt, np.float32)                           # (cin, cout, 4, 4)
    W_out = 2 * W
    wof = W_out * cout
    wof_pad = _round_up(wof, LANE)
    # out row i=2m+a uses padded rows m+off with kernel row kh:
    kh_tab = ((3, 1), (2, 0))                                # [phase a][tap r]
    taps = np.zeros((4, Wp * cin, wof_pad), np.float32)
    t = 0
    for a in range(2):
        for r in range(2):
            kh = kh_tab[a][r]
            for j in range(W_out):
                for pw in range(Wp):
                    kw = j + 3 - 2 * pw
                    if 0 <= kw < K:
                        taps[t, pw * cin:(pw + 1) * cin,
                             j * cout:(j + 1) * cout] = w[:, :, kh, kw]
            t += 1
    bias = np.zeros((1, wof_pad), np.float32)
    bias[0, :wof] = np.tile(np.asarray(b, np.float32), W_out)
    plan = dict(pads=((1, 1), (1, Wp - W - 1)),
                phase_offsets=((0, 1), (1, 2)),
                ho=H, W_out=W_out, cout=cout, n_phase=2, s2d=False,
                wof_pad=wof_pad)
    return taps, bias, plan


def _prep_conv_s2(wc, b, H, W, cin, cout, K=4):
    """Conv2d(k=4, s=2, p=1): direct stride-2 via row space-to-depth (2 taps)."""
    assert H % 2 == 0 and W % 2 == 0
    assert (LANE // 2) % cin == 0
    Wp = _round_up((W + 2) * cin, LANE // 2) // cin
    wf = 2 * Wp * cin
    w = np.asarray(wc, np.float32)                           # (cout, cin, 4, 4)
    H_out, W_out = H // 2, W // 2
    wof = W_out * cout
    wof_pad = _round_up(wof, LANE)
    taps = np.zeros((2, wf, wof_pad), np.float32)
    for t in range(2):                    # s2d row offset (padded rows 2m+2t+r)
        for r in range(2):
            kh = 2 * t + r
            for j in range(W_out):
                for kw in range(K):
                    pw = 2 * j + kw
                    base = r * Wp * cin + pw * cin
                    taps[t, base:base + cin, j * cout:(j + 1) * cout] = \
                        w[:, :, kh, kw].T
    bias = np.zeros((1, wof_pad), np.float32)
    bias[0, :wof] = np.tile(np.asarray(b, np.float32), W_out)
    plan = dict(pads=((1, 1), (1, Wp - W - 1)),
                phase_offsets=((0, 1),),
                ho=H_out, W_out=W_out, cout=cout, n_phase=1, s2d=True,
                wof_pad=wof_pad)
    return taps, bias, plan


def _make_branch(kind, gamma, beta, w, b, H, W, cin, cout):
    if kind == "deconv_s1":
        taps, bias, plan = _prep_deconv_s1(w, b, H, W, cin, cout)
    elif kind == "deconv_s2":
        taps, bias, plan = _prep_deconv_s2(w, b, H, W, cin, cout)
    else:
        taps, bias, plan = _prep_conv_s2(w, b, H, W, cin, cout)
    wf = taps.shape[1]
    assert cin <= 16, "roll-based IGDN path targets small C (see TODO in kernel)"
    tables, shifts, beta_t = _igdn_roll_tables(gamma, beta, wf, cin)
    plan["gdn_shifts"] = shifts
    arrs = dict(gdn_a=jnp.asarray(tables), beta_t=jnp.asarray(beta_t),
                taps=jnp.asarray(taps, MXU_INPUT_DTYPE),
                bias_f=jnp.asarray(bias))
    return arrs, plan


def init_got_conv_params(key, cin, cout, H, W, kernel_size=5):
    """Random (post-reparameterization) parameters + branch plans/packed weights."""
    assert kernel_size == 5 and H % 2 == 0 and W % 2 == 0
    ks = jax.random.split(key, 16)

    def igdn_raw(c, k1, k2):
        gamma = (0.1 * np.eye(c, dtype=np.float32)
                 + 0.01 * np.asarray(jax.random.uniform(k1, (c, c)), np.float32))
        beta = 1.0 + 0.1 * np.asarray(jax.random.uniform(k2, (c,)), np.float32)
        return gamma, beta

    def deconv_raw(ci, co, k, kw_, kb_):
        wt = np.asarray(jax.random.normal(kw_, (ci, co, k, k)),
                        np.float32) / (k * k * ci) ** 0.5
        return wt, 0.01 * np.asarray(jax.random.normal(kb_, (co,)), np.float32)

    def conv_raw(ci, co, k, kw_, kb_):
        w = np.asarray(jax.random.normal(kw_, (co, ci, k, k)),
                       np.float32) / (k * k * ci) ** 0.5
        return w, 0.01 * np.asarray(jax.random.normal(kb_, (co,)), np.float32)

    params, plans, raw = {}, {}, {}
    g, be = igdn_raw(cin, ks[0], ks[1]); w, bb = deconv_raw(cin, cout, 5, ks[2], ks[3])
    params["hh"], plans["hh"] = _make_branch("deconv_s1", g, be, w, bb, H, W, cin, cout)
    raw["hh"] = dict(igdn=(g, be), conv=(w, bb))

    g, be = igdn_raw(cin, ks[4], ks[5]); w, bb = deconv_raw(cin, cout, 5, ks[6], ks[7])
    params["ll"], plans["ll"] = _make_branch("deconv_s1", g, be, w, bb, H // 2, W // 2, cin, cout)
    raw["ll"] = dict(igdn=(g, be), conv=(w, bb))

    g, be = igdn_raw(cout, ks[8], ks[9]); w, bb = deconv_raw(cout, cout, 4, ks[10], ks[11])
    params["lh"], plans["lh"] = _make_branch("deconv_s2", g, be, w, bb, H // 2, W // 2, cout, cout)
    raw["lh"] = dict(igdn=(g, be), conv=(w, bb))

    g, be = igdn_raw(cout, ks[12], ks[13]); w, bb = conv_raw(cout, cout, 4, ks[14], ks[15])
    params["hl"], plans["hl"] = _make_branch("conv_s2", g, be, w, bb, H, W, cout, cout)
    raw["hl"] = dict(igdn=(g, be), conv=(w, bb))
    return params, plans, raw


# ----------------------- pure-JAX reference (for checking) -------------------

_HI = jax.lax.Precision.HIGHEST


def _ref_igdn(x, gamma_oi, beta):
    norm = jnp.asarray(beta) + jnp.einsum('nhwc,dc->nhwd', x * x,
                                          jnp.asarray(gamma_oi), precision=_HI)
    return x * jnp.sqrt(norm)


def _ref_deconv_s1(x, wt, b):
    k = wt.shape[-1]; p = (k - 1) // 2
    w_corr = jnp.transpose(jnp.flip(jnp.asarray(wt), (2, 3)), (2, 3, 0, 1))
    xp = jnp.pad(x, ((0, 0), (p, p), (p, p), (0, 0)))
    y = jax.lax.conv_general_dilated(xp, w_corr, (1, 1), 'VALID',
                                     dimension_numbers=('NHWC', 'HWIO', 'NHWC'),
                                     precision=_HI)
    return y + jnp.asarray(b)


def _ref_deconv_s2(x, wt, b):
    w_corr = jnp.transpose(jnp.flip(jnp.asarray(wt), (2, 3)), (2, 3, 0, 1))
    n, h, wd, c = x.shape
    dil = jnp.zeros((n, 2 * h - 1, 2 * wd - 1, c), x.dtype).at[:, ::2, ::2, :].set(x)
    dil = jnp.pad(dil, ((0, 0), (2, 2), (2, 2), (0, 0)))
    y = jax.lax.conv_general_dilated(dil, w_corr, (1, 1), 'VALID',
                                     dimension_numbers=('NHWC', 'HWIO', 'NHWC'),
                                     precision=_HI)
    return y + jnp.asarray(b)


def _ref_conv_s2(x, wc, b):
    w_hwio = jnp.transpose(jnp.asarray(wc), (2, 3, 1, 0))
    xp = jnp.pad(x, ((0, 0), (1, 1), (1, 1), (0, 0)))
    y = jax.lax.conv_general_dilated(xp, w_hwio, (2, 2), 'VALID',
                                     dimension_numbers=('NHWC', 'HWIO', 'NHWC'),
                                     precision=_HI)
    return y + jnp.asarray(b)


def _ref_forward(x_h, x_l, raw):
    hh = _ref_deconv_s1(_ref_igdn(x_h, *raw["hh"]["igdn"]), *raw["hh"]["conv"])
    ll = _ref_deconv_s1(_ref_igdn(x_l, *raw["ll"]["igdn"]), *raw["ll"]["conv"])
    lh = _ref_deconv_s2(_ref_igdn(ll, *raw["lh"]["igdn"]), *raw["lh"]["conv"])
    out_h = hh + lh
    out_l = ll + _ref_conv_s2(_ref_igdn(hh, *raw["hl"]["igdn"]), *raw["hl"]["conv"])
    return out_h, out_l


# ------------------------------------ main ------------------------------------

if __name__ == "__main__":
    key = jax.random.PRNGKey(0)
    k_h, k_l, k_p = jax.random.split(key, 3)

    N, Cin, Cout, H, W = 2, 4, 8, 16, 16
    # PyTorch-style NCHW inputs, transposed to the kernels' NHWC layout.
    x_h = jnp.transpose(jax.random.normal(k_h, (N, Cin, H, W), jnp.float32),
                        (0, 2, 3, 1))
    x_l = jnp.transpose(jax.random.normal(k_l, (N, Cin, H // 2, W // 2), jnp.float32),
                        (0, 2, 3, 1))

    params, plans, raw = init_got_conv_params(k_p, Cin, Cout, H, W)

    fwd = jax.jit(functools.partial(got_conv_forward, plans=plans,
                                    is_endpoint=False))
    out_h, out_l = fwd(x_h, x_l, params)
    jax.block_until_ready((out_h, out_l))

    assert out_h.shape == (N, H, W, Cout), out_h.shape
    assert out_l.shape == (N, H // 2, W // 2, Cout), out_l.shape
    assert bool(jnp.all(jnp.isfinite(out_h))) and bool(jnp.all(jnp.isfinite(out_l)))

    # cross-check against a plain-JAX (f32, HIGHEST precision) reference of the
    # torch module; tolerance accounts for bf16 MXU operands (f32 accumulation).
    ref_h, ref_l = _ref_forward(x_h, x_l, raw)
    for name, got, want in (("out_h", out_h, ref_h), ("out_l", out_l, ref_l)):
        err = float(jnp.max(jnp.abs(got - want)))
        scale = float(jnp.max(jnp.abs(want))) + 1.0
        assert err <= 3e-2 * scale, f"{name}: max abs err {err} (scale {scale})"

    print("KERNEL_OK")
</pallas_src>

<mosaic_0001>
module attributes {stable_mosaic.version = 11 : i64} {
  func.func @k(%arg0: memref<8x128xf32, #tpu.memory_space<vmem>>, %arg1: memref<8x128xf32, #tpu.memory_space<vmem>>) attributes {dimension_semantics = [], scalar_prefetch = 0 : i64, scratch_operands = 0 : i64, tpu.core_type = #tpu.core_type<tc>} {
    %c0 = arith.constant 0 : index
    %c0_0 = arith.constant 0 : index
    %0 = vector.load %arg0[%c0, %c0_0] : memref<8x128xf32, #tpu.memory_space<vmem>>, vector<8x128xf32>
    %c1_i32 = arith.constant 1 : i32
    %1 = tpu.dynamic_rotate %0 by %c1_i32 dim 1 : vector<8x128xf32>, i32 -> vector<8x128xf32>
    %c0_1 = arith.constant 0 : index
    %c0_2 = arith.constant 0 : index
    %2 = vector.load %arg1[%c0_1, %c0_2] : memref<8x128xf32, #tpu.memory_space<vmem>>, vector<8x128xf32>
    tpu.vector_store %arg1[%c0_1, %c0_2], %1 {strides = array<i32>} : memref<8x128xf32, #tpu.memory_space<vmem>>, vector<8x128xf32>,
    return
  }
}

</mosaic_0001>

<llo_original>
// kernel: tpu_custom_call.1
$region0: #{tpu_custom_call.1}
  #allocation0 [shape = 'u32[]', space=smem, size = 0x4, offset = 0x4, fixed_abs, tag = 'smem constant byte address 0x4 - core index']
  #allocation1 [shape = 'u32[144,128]{1,0:T(1,128)}', space=vmem, size = 0x12000, scoped, tag = 'internal scratch']
  %s0 = inlined_call_operand.hbm [shape: f32[8,128], index: 0, kind: input, shape index: {}]
  %s1 = inlined_call_operand.hbm [shape: f32[8,128], index: 1, kind: output, shape index: {}]
  %s2 = sld [smem:[#allocation0]]
  $region18: #{tpu_custom_call.1} parent=0
    _
  %s4 = ssub.s32 1, %s2
  %s5 = scalar_select 0, %s4, %s2
  $region1: #{tpu_custom_call.1} parent=0
    #allocation2 [shape = 'u8[4096]{0}', space=vmem, size = 0x1000, scoped, tag = 'input window, operand 0, single buffered']
    #allocation3 [shape = 's32[1]{0}', space=sflag, size = 0x4, scoped, tag = 'scoped memory for tpu_custom_call.1']
    #allocation4 [shape = 's32[1]{0}', space=sflag, size = 0x4, scoped, tag = 'scoped memory for tpu_custom_call.1']
    #allocation5 [shape = 'u8[4096]{0}', space=vmem, size = 0x1000, scoped, tag = 'output window, operand 0, single buffered']
    %6 = vsyncpa [#allocation3], 0
    %7 = vsyncpa [#allocation4], 0
    // Predicated region
    $region2: #{tpu_custom_call.1} parent=1 // pred_check
      _
    $region3: #{tpu_custom_call.1} parent=1 // pred_check_branch
      %9 = sbr.rel (0) target = $region5
    $region4: #{tpu_custom_call.1} parent=1 // pred_region
      %s11 = ssub.s32 128, 128
      %12 = vsyncadd [#allocation3], %s11
      %s14 = sshll.u32 [#allocation2], 4
      %s15 = int_to_ptr.vmem [resolvable:$true] %s14
      %17 = dma.hbm_to_vmem [thread:$0]  %s0, 128, %s15, [#allocation3]
    $region5: #{tpu_custom_call.1} parent=1 // pred_fallthru
      _
    // Predicated region
    $region6: #{tpu_custom_call.1} parent=1 // pred_check
      _
    $region7: #{tpu_custom_call.1} parent=1 // pred_check_branch
      %19 = sbr.rel (0) target = $region9
    $region8: #{tpu_custom_call.1} parent=1 // pred_region
      %20 = dma.done [#allocation3], 128
    $region9: #{tpu_custom_call.1} parent=1 // pred_fallthru
      _
    %v21 = vld [vmem:[#allocation2] sm:$0xff]
    %22 = vrot.lane.b32.xlu0 %v21, 1
    %v23 = vpop.permute.xlu0 %22
    %24 = vst [vmem:[#allocation5] sm:$0xff] %v23
    // Predicated region
    $region10: #{tpu_custom_call.1} parent=1 // pred_check
      _
    $region11: #{tpu_custom_call.1} parent=1 // pred_check_branch
      %26 = sbr.rel (0) target = $region13
    $region12: #{tpu_custom_call.1} parent=1 // pred_region
      %s28 = ssub.s32 128, 128
      %29 = vsyncadd [#allocation4], %s28
      %s31 = sshll.u32 [#allocation5], 4
      %s32 = int_to_ptr.vmem [resolvable:$true] %s31
      %34 = dma.vmem_to_hbm [thread:$0]  %s32, 128, %s1, [#allocation4]
    $region13: #{tpu_custom_call.1} parent=1 // pred_fallthru
      _
    // Predicated region
    $region14: #{tpu_custom_call.1} parent=1 // pred_check
      _
    $region15: #{tpu_custom_call.1} parent=1 // pred_check_branch
      %36 = sbr.rel (0) target = $region17
    $region16: #{tpu_custom_call.1} parent=1 // pred_region
      %37 = dma.done [#allocation4], 128
    $region17: #{tpu_custom_call.1} parent=1 // pred_fallthru
      _
    %38 = vsyncpa [#allocation3], 1
    %39 = vsyncpa [#allocation4], 1

</llo_original>
